<compile_context>
chip_gen: v6e
topology: v6e:2x2x1
jax: 0.10.0
libtpu: 0.0.40
codegen_flags: <defaults>
</compile_context>

<pallas_src>
import jax
import jax.numpy as jnp
from jax.experimental import pallas as pl
from jax.experimental.pallas import tpu as pltpu

CHUNK = 256  # lanes per in-kernel chunk; multiple of 128, keeps h1/h2 in vregs


def _round_up(n, m):
    return ((n + m - 1) // m) * m


def mlp_kernel(x_ref, wb1_ref, w2_ref, b2_ref, w3_ref, b3_ref, o_ref):
    # x_ref: (2, TILE_B) f32; wb1 (64, 3) = [w1 | b1]; w2 (32, 64); b2 (32, 1);
    # w3 (32, 1); b3 (1, 1); o_ref: (1, TILE_B).
    # Weights are loaded / sliced once per grid step (resident in VMEM).
    wb1 = wb1_ref[...]
    w1a, w1b, b1 = wb1[:, 0:1], wb1[:, 1:2], wb1[:, 2:3]
    w2 = w2_ref[...]
    b2 = b2_ref[...]
    w3 = w3_ref[...]
    b3 = b3_ref[...]

    tile_b = x_ref.shape[1]
    n_chunks = tile_b // CHUNK          # tile_b is forced to a multiple of CHUNK

    # Static, 256-lane-aligned chunk slices: every load/store is lane-dense and
    # statically addressed (no dynamic lane offsets), and per-chunk h1/h2 fit
    # comfortably in the 64-vreg register file (no VMEM round-trips).
    for c in range(n_chunks):
        s = c * CHUNK
        x = x_ref[:, s:s + CHUNK]                                   # (2, CHUNK)

        # Layer 1 (in=2): two broadcast multiply-adds on the VPU.
        h1 = w1a * x[0:1, :] + w1b * x[1:2, :] + b1
        h1 = jnp.maximum(h1, 0.0)                                   # (64, CHUNK)

        # Layer 2 (64 -> 32): the only real matmul, MXU with f32 accumulation.
        h2 = jnp.dot(w2, h1, preferred_element_type=jnp.float32) + b2
        h2 = jnp.maximum(h2, 0.0)                                   # (32, CHUNK)

        # Layer 3 (32 -> 1): elementwise multiply + sublane reduce (VPU + XLU),
        # avoids an M=1 MXU push/pop.
        h3 = jnp.sum(w3 * h2, axis=0, keepdims=True) + b3
        o_ref[:, s:s + CHUNK] = h3.astype(o_ref.dtype)              # (1, CHUNK)


def _mlp_pallas(x_t, params, tile_b):
    """Feature-major core: x_t (2, Bp) with Bp % tile_b == 0 -> (1, Bp)."""
    wb1, w2, b2, w3, b3 = params
    b_pad = x_t.shape[1]
    n_tiles = b_pad // tile_b
    # NOTE(v7x): for very large B prefer an even n_tiles so the "parallel"
    # batch axis splits evenly across the two TensorCores.

    const = lambda a: pl.BlockSpec(a.shape, lambda i: (0, 0))
    param_bytes = sum(int(a.size) * a.dtype.itemsize for a in (wb1, w2, b2, w3, b3))
    cost = pl.CostEstimate(
        flops=2 * b_pad * (2 * 64 + 64 * 32 + 32),
        transcendentals=0,
        bytes_accessed=b_pad * 12 + param_bytes,   # 8 B in + 4 B out per row
    )

    return pl.pallas_call(
        mlp_kernel,
        out_shape=jax.ShapeDtypeStruct((1, b_pad), x_t.dtype),
        grid_spec=pltpu.PrefetchScalarGridSpec(
            num_scalar_prefetch=0,
            grid=(n_tiles,),
            in_specs=[
                pl.BlockSpec((2, tile_b), lambda i: (0, i)),   # x tile (lane-dense)
                const(wb1), const(w2), const(b2),              # resident weights
                const(w3), const(b3),
            ],
            out_specs=pl.BlockSpec((1, tile_b), lambda i: (0, i)),
        ),
        compiler_params=pltpu.CompilerParams(
            dimension_semantics=("parallel",),       # shard batch tiles over TCs
            vmem_limit_bytes=32 * 1024 * 1024,       # explicit; actual use << this
        ),
        cost_estimate=cost,
    )(x_t, wb1, w2, b2, w3, b3)


def health_model_forward(x, params, tile_b=16384):
    """x: (B, 2) float32 -> (B, 1) float32 (PyTorch-layout wrapper)."""
    B = x.shape[0]
    # Force tile_b to a multiple of CHUNK (hence of 128) and cap at padded batch.
    tile_b = _round_up(max(int(tile_b), CHUNK), CHUNK)
    tile_b = min(tile_b, _round_up(B, CHUNK))
    b_pad = _round_up(B, tile_b)

    x_t = x.T                                  # (2, B) feature-major
    if b_pad != B:
        x_t = jnp.pad(x_t, ((0, 0), (0, b_pad - B)))
    out_t = _mlp_pallas(x_t, params, tile_b)   # (1, b_pad)
    return out_t[0, :B].reshape(B, 1)


def init_params(key):
    """nn.Linear-style init. b1 is packed into w1 -> wb1 (64,3); w3 kept (32,1)."""
    ks = jax.random.split(key, 6)

    def linear(kw, kb, fan_in, fan_out):
        bound = 1.0 / jnp.sqrt(fan_in)
        w = jax.random.uniform(kw, (fan_out, fan_in), jnp.float32, -bound, bound)
        b = jax.random.uniform(kb, (fan_out, 1), jnp.float32, -bound, bound)
        return w, b

    w1, b1 = linear(ks[0], ks[1], 2, 64)
    w2, b2 = linear(ks[2], ks[3], 64, 32)
    w3, b3 = linear(ks[4], ks[5], 32, 1)
    wb1 = jnp.concatenate([w1, b1], axis=1)    # (64, 3) = [w1 | b1]
    return (wb1, w2, b2, w3.T, b3)


def reference_forward(x, params):
    wb1, w2, b2, w3, b3 = params
    w1, b1 = wb1[:, :2], wb1[:, 2:3]
    h = jnp.maximum(x @ w1.T + b1.T, 0.0)
    h = jnp.maximum(h @ w2.T + b2.T, 0.0)
    return h @ w3 + b3.T


if __name__ == "__main__":
    key = jax.random.PRNGKey(0)
    kx, kp = jax.random.split(key)
    params = init_params(kp)

    # Small single-tile case (batch=8, padded to one 256-lane tile, 1 chunk).
    x = jax.random.normal(kx, (8, 2), dtype=jnp.float32)
    out = health_model_forward(x, params)
    jax.block_until_ready(out)
    assert out.shape == (8, 1)
    assert jnp.allclose(out, reference_forward(x, params), atol=1e-5, rtol=1e-5)

    # Multi-tile case (batch=300, tile_b=256 -> 2 grid steps, exercises padding
    # and the tile_b rounding path).
    x2 = jax.random.normal(kx, (300, 2), dtype=jnp.float32)
    out2 = health_model_forward(x2, params, tile_b=256)
    jax.block_until_ready(out2)
    assert out2.shape == (300, 1)
    assert jnp.allclose(out2, reference_forward(x2, params), atol=1e-5, rtol=1e-5)

    print("KERNEL_OK")
</pallas_src>

<mosaic_0001>
module attributes {stable_mosaic.version = 11 : i64} {
  func.func @mlp_kernel(%arg0: i32, %arg1: memref<2x256xf32, #tpu.memory_space<vmem>>, %arg2: memref<64x3xf32, #tpu.memory_space<vmem>>, %arg3: memref<32x64xf32, #tpu.memory_space<vmem>>, %arg4: memref<32x1xf32, #tpu.memory_space<vmem>>, %arg5: memref<32x1xf32, #tpu.memory_space<vmem>>, %arg6: memref<1x1xf32, #tpu.memory_space<vmem>>, %arg7: memref<1x256xf32, #tpu.memory_space<vmem>>) attributes {dimension_semantics = [#tpu.dimension_semantics<parallel>], iteration_bounds = array<i64: 1>, scalar_prefetch = 0 : i64, scratch_operands = 0 : i64, tpu.core_type = #tpu.core_type<tc>, window_params = [{transform_indices = @transform_0, window_bounds = array<i64: 2, 256>}, {pipeline_mode = #tpu.pipeline_mode<synchronous>, transform_indices = @transform_1, window_bounds = array<i64: 64, 3>}, {pipeline_mode = #tpu.pipeline_mode<synchronous>, transform_indices = @transform_2, window_bounds = array<i64: 32, 64>}, {pipeline_mode = #tpu.pipeline_mode<synchronous>, transform_indices = @transform_3, window_bounds = array<i64: 32, 1>}, {pipeline_mode = #tpu.pipeline_mode<synchronous>, transform_indices = @transform_4, window_bounds = array<i64: 32, 1>}, {pipeline_mode = #tpu.pipeline_mode<synchronous>, transform_indices = @transform_5, window_bounds = array<i64: 1, 1>}, {transform_indices = @transform_6, window_bounds = array<i64: 1, 256>}]} {
    %c0 = arith.constant 0 : index
    %c0_0 = arith.constant 0 : index
    %0 = vector.load %arg2[%c0, %c0_0] : memref<64x3xf32, #tpu.memory_space<vmem>>, vector<64x3xf32>
    %1 = vector.extract_strided_slice %0 {offsets = [0, 0], sizes = [64, 1], strides = [1, 1]} : vector<64x3xf32> to vector<64x1xf32>
    %2 = vector.extract_strided_slice %0 {offsets = [0, 1], sizes = [64, 1], strides = [1, 1]} : vector<64x3xf32> to vector<64x1xf32>
    %3 = vector.extract_strided_slice %0 {offsets = [0, 2], sizes = [64, 1], strides = [1, 1]} : vector<64x3xf32> to vector<64x1xf32>
    %c0_1 = arith.constant 0 : index
    %c0_2 = arith.constant 0 : index
    %4 = vector.load %arg3[%c0_1, %c0_2] : memref<32x64xf32, #tpu.memory_space<vmem>>, vector<32x64xf32>
    %c0_3 = arith.constant 0 : index
    %c0_4 = arith.constant 0 : index
    %5 = vector.load %arg4[%c0_3, %c0_4] : memref<32x1xf32, #tpu.memory_space<vmem>>, vector<32x1xf32>
    %c0_5 = arith.constant 0 : index
    %c0_6 = arith.constant 0 : index
    %6 = vector.load %arg5[%c0_5, %c0_6] : memref<32x1xf32, #tpu.memory_space<vmem>>, vector<32x1xf32>
    %c0_7 = arith.constant 0 : index
    %c0_8 = arith.constant 0 : index
    %7 = vector.load %arg6[%c0_7, %c0_8] : memref<1x1xf32, #tpu.memory_space<vmem>>, vector<1x1xf32>
    %c0_9 = arith.constant 0 : index
    %c0_10 = arith.constant 0 : index
    %8 = vector.load %arg1[%c0_9, %c0_10] : memref<2x256xf32, #tpu.memory_space<vmem>>, vector<2x256xf32>
    %9 = vector.extract_strided_slice %8 {offsets = [0, 0], sizes = [1, 256], strides = [1, 1]} : vector<2x256xf32> to vector<1x256xf32>
    %10 = vector.broadcast %1 : vector<64x1xf32> to vector<64x256xf32>
    %11 = vector.broadcast %9 : vector<1x256xf32> to vector<64x256xf32>
    %12 = arith.mulf %10, %11 : vector<64x256xf32>
    %13 = vector.extract_strided_slice %8 {offsets = [1, 0], sizes = [1, 256], strides = [1, 1]} : vector<2x256xf32> to vector<1x256xf32>
    %14 = vector.broadcast %2 : vector<64x1xf32> to vector<64x256xf32>
    %15 = vector.broadcast %13 : vector<1x256xf32> to vector<64x256xf32>
    %16 = arith.mulf %14, %15 : vector<64x256xf32>
    %17 = arith.addf %12, %16 : vector<64x256xf32>
    %18 = vector.broadcast %3 : vector<64x1xf32> to vector<64x256xf32>
    %19 = arith.addf %17, %18 : vector<64x256xf32>
    %cst = arith.constant 0.000000e+00 : f32
    %20 = vector.broadcast %cst : f32 to vector<64x256xf32>
    %21 = arith.maximumf %19, %20 : vector<64x256xf32>
    %cst_11 = arith.constant dense<0.000000e+00> : vector<32x256xf32>
    %22 = tpu.matmul %4, %21, %cst_11 {dimension_numbers = #tpu.dot_dimension_numbers<[1], [0], [0], [1], [0, 0, 1, 1], [], []>} : vector<32x64xf32>, vector<64x256xf32>, vector<32x256xf32> -> vector<32x256xf32>
    %23 = vector.broadcast %5 : vector<32x1xf32> to vector<32x256xf32>
    %24 = arith.addf %22, %23 : vector<32x256xf32>
    %cst_12 = arith.constant 0.000000e+00 : f32
    %25 = vector.broadcast %cst_12 : f32 to vector<32x256xf32>
    %26 = arith.maximumf %24, %25 : vector<32x256xf32>
    %27 = vector.broadcast %6 : vector<32x1xf32> to vector<32x256xf32>
    %28 = arith.mulf %27, %26 : vector<32x256xf32>
    %cst_13 = arith.constant dense<0.000000e+00> : vector<256xf32>
    %29 = vector.multi_reduction <add>, %28, %cst_13 [0] : vector<32x256xf32> to vector<256xf32>
    %30 = vector.shape_cast %29 : vector<256xf32> to vector<1x256xf32>
    %31 = vector.broadcast %7 : vector<1x1xf32> to vector<1x256xf32>
    %32 = arith.addf %30, %31 : vector<1x256xf32>
    %c0_14 = arith.constant 0 : index
    %c0_15 = arith.constant 0 : index
    %33 = vector.load %arg7[%c0_14, %c0_15] : memref<1x256xf32, #tpu.memory_space<vmem>>, vector<1x256xf32>
    tpu.vector_store %arg7[%c0_14, %c0_15], %32 {strides = array<i32>} : memref<1x256xf32, #tpu.memory_space<vmem>>, vector<1x256xf32>,
    return
  }
  func.func @transform_0(%arg0: i32) -> (i32, i32) {
    %c0_i32 = arith.constant 0 : i32
    %c0_i32_0 = arith.constant 0 : i32
    return %c0_i32, %arg0 : i32, i32
  }
  func.func @transform_1(%arg0: i32) -> (i32, i32) {
    %c0_i32 = arith.constant 0 : i32
    %c0_i32_0 = arith.constant 0 : i32
    %c0_i32_1 = arith.constant 0 : i32
    return %c0_i32, %c0_i32_0 : i32, i32
  }
  func.func @transform_2(%arg0: i32) -> (i32, i32) {
    %c0_i32 = arith.constant 0 : i32
    %c0_i32_0 = arith.constant 0 : i32
    %c0_i32_1 = arith.constant 0 : i32
    return %c0_i32, %c0_i32_0 : i32, i32
  }
  func.func @transform_3(%arg0: i32) -> (i32, i32) {
    %c0_i32 = arith.constant 0 : i32
    %c0_i32_0 = arith.constant 0 : i32
    %c0_i32_1 = arith.constant 0 : i32
    return %c0_i32, %c0_i32_0 : i32, i32
  }
  func.func @transform_4(%arg0: i32) -> (i32, i32) {
    %c0_i32 = arith.constant 0 : i32
    %c0_i32_0 = arith.constant 0 : i32
    %c0_i32_1 = arith.constant 0 : i32
    return %c0_i32, %c0_i32_0 : i32, i32
  }
  func.func @transform_5(%arg0: i32) -> (i32, i32) {
    %c0_i32 = arith.constant 0 : i32
    %c0_i32_0 = arith.constant 0 : i32
    %c0_i32_1 = arith.constant 0 : i32
    return %c0_i32, %c0_i32_0 : i32, i32
  }
  func.func @transform_6(%arg0: i32) -> (i32, i32) {
    %c0_i32 = arith.constant 0 : i32
    %c0_i32_0 = arith.constant 0 : i32
    return %c0_i32, %arg0 : i32, i32
  }
}

</mosaic_0001>

<llo_original>
// kernel: tpu_custom_call.1
$region0: #{tpu_custom_call.1}
  #allocation0 [shape = 'u32[]', space=smem, size = 0x4, offset = 0x4, fixed_abs, tag = 'smem constant byte address 0x4 - core index']
  #allocation1 [shape = 'u32[144,128]{1,0:T(1,128)}', space=vmem, size = 0x12000, scoped, tag = 'internal scratch']
  #allocation2 [shape = 'f32[1,1]{1,0:T(1,128)S(1)}', space=vmem, size = 0x200, scoped, tag = 'scoped memory for tpu_custom_call.1']
  %s0 = inlined_call_operand.vmem [shape: f32[2,256], index: 0, kind: input, shape index: {}]
  %s1 = inlined_call_operand.vmem [shape: f32[64,3], index: 1, kind: input, shape index: {}]
  %s2 = inlined_call_operand.vmem [shape: f32[32,64], index: 2, kind: input, shape index: {}]
  %s3 = inlined_call_operand.vmem [shape: f32[32,1], index: 3, kind: input, shape index: {}]
  %s4 = inlined_call_operand.vmem [shape: f32[32,1], index: 4, kind: input, shape index: {}]
  %s5 = inlined_call_operand.<no memory space> [shape: f32[1,1], index: 5, kind: input, shape index: {}]
  %s6 = inlined_call_operand.hbm [shape: f32[1,256], index: 6, kind: output, shape index: {}]
  %s7 = sld [smem:[#allocation0]]
  $region34: #{tpu_custom_call.1} parent=0
    _
  %s9 = ssub.s32 1, %s7
  %s10 = scalar_select 0, %s9, %s7
  %v11 = vstv %s5
  %12 = vst [vmem:[#allocation2] sm:$0x1] %v11
  $region1: #{tpu_custom_call.1} parent=0
    #allocation3 [shape = 'u8[1024]{0}', space=vmem, size = 0x400, scoped, tag = 'output window, operand 0, single buffered']
    #allocation4 [shape = 's32[1]{0}', space=sflag, size = 0x4, scoped, tag = 'scoped memory for tpu_custom_call.1']
    %13 = vsyncpa [#allocation4], 0
    // Predicated region
    $region2: #{tpu_custom_call.1} parent=1 // pred_check
      _
    $region3: #{tpu_custom_call.1} parent=1 // pred_check_branch
      %15 = sbr.rel (0) target = $region5
    $region4: #{tpu_custom_call.1} parent=1 // pred_region
      _
    $region5: #{tpu_custom_call.1} parent=1 // pred_fallthru
      _
    // Predicated region
    $region6: #{tpu_custom_call.1} parent=1 // pred_check
      _
    $region7: #{tpu_custom_call.1} parent=1 // pred_check_branch
      %17 = sbr.rel (0) target = $region9
    $region8: #{tpu_custom_call.1} parent=1 // pred_region
      _
    $region9: #{tpu_custom_call.1} parent=1 // pred_fallthru
      _
    // Predicated region
    $region10: #{tpu_custom_call.1} parent=1 // pred_check
      _
    $region11: #{tpu_custom_call.1} parent=1 // pred_check_branch
      %19 = sbr.rel (0) target = $region13
    $region12: #{tpu_custom_call.1} parent=1 // pred_region
      _
    $region13: #{tpu_custom_call.1} parent=1 // pred_fallthru
      _
    // Predicated region
    $region14: #{tpu_custom_call.1} parent=1 // pred_check
      _
    $region15: #{tpu_custom_call.1} parent=1 // pred_check_branch
      %21 = sbr.rel (0) target = $region17
    $region16: #{tpu_custom_call.1} parent=1 // pred_region
      _
    $region17: #{tpu_custom_call.1} parent=1 // pred_fallthru
      _
    // Predicated region
    $region18: #{tpu_custom_call.1} parent=1 // pred_check
      _
    $region19: #{tpu_custom_call.1} parent=1 // pred_check_branch
      %23 = sbr.rel (0) target = $region21
    $region20: #{tpu_custom_call.1} parent=1 // pred_region
      _
    $region21: #{tpu_custom_call.1} parent=1 // pred_fallthru
      _
    // Predicated region
    $region22: #{tpu_custom_call.1} parent=1 // pred_check
      _
    $region23: #{tpu_custom_call.1} parent=1 // pred_check_branch
      %25 = sbr.rel (0) target = $region25
    $region24: #{tpu_custom_call.1} parent=1 // pred_region
      _
    $region25: #{tpu_custom_call.1} parent=1 // pred_fallthru
      _
    %v26 = vld [vmem:[%s1] sm:$0xff]
    %v27 = vld [vmem:[%s1 + $0x8] sm:$0xff]
    %v28 = vld [vmem:[%s1 + $0x10] sm:$0xff]
    %v29 = vld [vmem:[%s1 + $0x18] sm:$0xff]
    %v30 = vld [vmem:[%s1 + $0x20] sm:$0xff]
    %v31 = vld [vmem:[%s1 + $0x28] sm:$0xff]
    %v32 = vld [vmem:[%s1 + $0x30] sm:$0xff]
    %v33 = vld [vmem:[%s1 + $0x38] sm:$0xff]
    %v34 = vld [vmem:[%s2] sm:$0xff]
    %v35 = vld [vmem:[%s2 + $0x8] sm:$0xff]
    %v36 = vld [vmem:[%s2 + $0x10] sm:$0xff]
    %v37 = vld [vmem:[%s2 + $0x18] sm:$0xff]
    %v38 = vld [vmem:[%s3] sm:$0xff]
    %v39 = vld [vmem:[%s3 + $0x8] sm:$0xff]
    %v40 = vld [vmem:[%s3 + $0x10] sm:$0xff]
    %v41 = vld [vmem:[%s3 + $0x18] sm:$0xff]
    %v42 = vld [vmem:[%s4] sm:$0xff]
    %v43 = vld [vmem:[%s4 + $0x8] sm:$0xff]
    %v44 = vld [vmem:[%s4 + $0x10] sm:$0xff]
    %v45 = vld [vmem:[%s4 + $0x18] sm:$0xff]
    %v46 = vld [vmem:[#allocation2] sm:$0x1]
    %v47 = vld [vmem:[%s0] sm:$0xf]
    %49 = vset.pattern.permute.xlu0 0
    %50 = vperm.xlu0 %49, %v26
    %v51 = vpop.permute.xlu0 %50
    %54 = vset.pattern.permute.xlu0 0
    %55 = vperm.xlu0 %54, %v27
    %v56 = vpop.permute.xlu0 %55
    %59 = vset.pattern.permute.xlu0 0
    %60 = vperm.xlu0 %59, %v28
    %v61 = vpop.permute.xlu0 %60
    %64 = vset.pattern.permute.xlu0 0
    %65 = vperm.xlu0 %64, %v29
    %v66 = vpop.permute.xlu0 %65
    %69 = vset.pattern.permute.xlu0 0
    %70 = vperm.xlu0 %69, %v30
    %v71 = vpop.permute.xlu0 %70
    %74 = vset.pattern.permute.xlu0 0
    %75 = vperm.xlu0 %74, %v31
    %v76 = vpop.permute.xlu0 %75
    %79 = vset.pattern.permute.xlu0 0
    %80 = vperm.xlu0 %79, %v32
    %v81 = vpop.permute.xlu0 %80
    %84 = vset.pattern.permute.xlu0 0
    %85 = vperm.xlu0 %84, %v33
    %v86 = vpop.permute.xlu0 %85
    %v89 = vlaneseq
    %v90 = vshrl.u32 %v89, 7
    %v91 = vsub.s32 0, %v90
    %v92 = vrot.slane %v47, %v91
    %v93 = vlaneseq
    %v94 = vshrl.u32 %v93, 7
    %v95 = vsub.s32 2, %v94
    %v96 = vrot.slane %v47, %v95
    %v99 = vlaneseq
    %v100 = vshrl.u32 %v99, 7
    %v101 = vsub.s32 0, %v100
    %v102 = vrot.slane %v92, %v101
    %v103 = vlaneseq
    %v104 = vshrl.u32 %v103, 7
    %v105 = vsub.s32 0, %v104
    %v106 = vrot.slane %v96, %v105
    %v107 = vmul.f32 %v51, %v102
    %v108 = vmul.f32 %v51, %v106
    %v109 = vmul.f32 %v56, %v102
    %v110 = vmul.f32 %v56, %v106
    %v111 = vmul.f32 %v61, %v102
    %v112 = vmul.f32 %v61, %v106
    %v113 = vmul.f32 %v66, %v102
    %v114 = vmul.f32 %v66, %v106
    %v115 = vmul.f32 %v71, %v102
    %v116 = vmul.f32 %v71, %v106
    %v117 = vmul.f32 %v76, %v102
    %v118 = vmul.f32 %v76, %v106
    %v119 = vmul.f32 %v81, %v102
    %v120 = vmul.f32 %v81, %v106
    %v121 = vmul.f32 %v86, %v102
    %v122 = vmul.f32 %v86, %v106
    %123 = vset.pattern.permute.xlu0 1
    %124 = vperm.xlu0 %123, %v26
    %v125 = vpop.permute.xlu0 %124
    %127 = vset.pattern.permute.xlu0 1
    %128 = vperm.xlu0 %127, %v27
    %v129 = vpop.permute.xlu0 %128
    %131 = vset.pattern.permute.xlu0 1
    %132 = vperm.xlu0 %131, %v28
    %v133 = vpop.permute.xlu0 %132
    %135 = vset.pattern.permute.xlu0 1
    %136 = vperm.xlu0 %135, %v29
    %v137 = vpop.permute.xlu0 %136
    %139 = vset.pattern.permute.xlu0 1
    %140 = vperm.xlu0 %139, %v30
    %v141 = vpop.permute.xlu0 %140
    %143 = vset.pattern.permute.xlu0 1
    %144 = vperm.xlu0 %143, %v31
    %v145 = vpop.permute.xlu0 %144
    %147 = vset.pattern.permute.xlu0 1
    %148 = vperm.xlu0 %147, %v32
    %v149 = vpop.permute.xlu0 %148
    %151 = vset.pattern.permute.xlu0 1
    %152 = vperm.xlu0 %151, %v33
    %v153 = vpop.permute.xlu0 %152
    %v155 = vlaneseq
    %v156 = vshrl.u32 %v155, 7
    %v157 = vsub.s32 1, %v156
    %v158 = vrot.slane %v47, %v157
    %v159 = vlaneseq
    %v160 = vshrl.u32 %v159, 7
    %v161 = vsub.s32 3, %v160
    %v162 = vrot.slane %v47, %v161
    %v165 = vlaneseq
    %v166 = vshrl.u32 %v165, 7
    %v167 = vsub.s32 1, %v166
    %v168 = vrot.slane %v158, %v167
    %v169 = vlaneseq
    %v170 = vshrl.u32 %v169, 7
    %v171 = vsub.s32 1, %v170
    %v172 = vrot.slane %v162, %v171
    %v173 = vmul.f32 %v125, %v168
    %v174 = vmul.f32 %v125, %v172
    %v175 = vmul.f32 %v129, %v168
    %v176 = vmul.f32 %v129, %v172
    %v177 = vmul.f32 %v133, %v168
    %v178 = vmul.f32 %v133, %v172
    %v179 = vmul.f32 %v137, %v168
    %v180 = vmul.f32 %v137, %v172
    %v181 = vmul.f32 %v141, %v168
    %v182 = vmul.f32 %v141, %v172
    %v183 = vmul.f32 %v145, %v168
    %v184 = vmul.f32 %v145, %v172
    %v185 = vmul.f32 %v149, %v168
    %v186 = vmul.f32 %v149, %v172
    %v187 = vmul.f32 %v153, %v168
    %v188 = vmul.f32 %v153, %v172
    %v189 = vadd.f32 %v107, %v173
    %v190 = vadd.f32 %v108, %v174
    %v191 = vadd.f32 %v109, %v175
    %v192 = vadd.f32 %v110, %v176
    %v193 = vadd.f32 %v111, %v177
    %v194 = vadd.f32 %v112, %v178
    %v195 = vadd.f32 %v113, %v179
    %v196 = vadd.f32 %v114, %v180
    %v197 = vadd.f32 %v115, %v181
    %v198 = vadd.f32 %v116, %v182
    %v199 = vadd.f32 %v117, %v183
    %v200 = vadd.f32 %v118, %v184
    %v201 = vadd.f32 %v119, %v185
    %v202 = vadd.f32 %v120, %v186
    %v203 = vadd.f32 %v121, %v187
    %v204 = vadd.f32 %v122, %v188
    %205 = vset.pattern.permute.xlu0 2
    %206 = vperm.xlu0 %205, %v26
    %v207 = vpop.permute.xlu0 %206
    %209 = vset.pattern.permute.xlu0 2
    %210 = vperm.xlu0 %209, %v27
    %v211 = vpop.permute.xlu0 %210
    %213 = vset.pattern.permute.xlu0 2
    %214 = vperm.xlu0 %213, %v28
    %v215 = vpop.permute.xlu0 %214
    %217 = vset.pattern.permute.xlu0 2
    %218 = vperm.xlu0 %217, %v29
    %v219 = vpop.permute.xlu0 %218
    %221 = vset.pattern.permute.xlu0 2
    %222 = vperm.xlu0 %221, %v30
    %v223 = vpop.permute.xlu0 %222
    %225 = vset.pattern.permute.xlu0 2
    %226 = vperm.xlu0 %225, %v31
    %v227 = vpop.permute.xlu0 %226
    %229 = vset.pattern.permute.xlu0 2
    %230 = vperm.xlu0 %229, %v32
    %v231 = vpop.permute.xlu0 %230
    %233 = vset.pattern.permute.xlu0 2
    %234 = vperm.xlu0 %233, %v33
    %v235 = vpop.permute.xlu0 %234
    %v237 = vadd.f32 %v189, %v207
    %v238 = vadd.f32 %v190, %v207
    %v239 = vadd.f32 %v191, %v211
    %v240 = vadd.f32 %v192, %v211
    %v241 = vadd.f32 %v193, %v215
    %v242 = vadd.f32 %v194, %v215
    %v243 = vadd.f32 %v195, %v219
    %v244 = vadd.f32 %v196, %v219
    %v245 = vadd.f32 %v197, %v223
    %v246 = vadd.f32 %v198, %v223
    %v247 = vadd.f32 %v199, %v227
    %v248 = vadd.f32 %v200, %v227
    %v249 = vadd.f32 %v201, %v231
    %v250 = vadd.f32 %v202, %v231
    %v251 = vadd.f32 %v203, %v235
    %v252 = vadd.f32 %v204, %v235
    %v253 = vmax.f32 %v237, 0.0
    %v254 = vmax.f32 %v238, 0.0
    %v255 = vmax.f32 %v239, 0.0
    %v256 = vmax.f32 %v240, 0.0
    %v257 = vmax.f32 %v241, 0.0
    %v258 = vmax.f32 %v242, 0.0
    %v259 = vmax.f32 %v243, 0.0
    %v260 = vmax.f32 %v244, 0.0
    %v261 = vmax.f32 %v245, 0.0
    %v262 = vmax.f32 %v246, 0.0
    %v263 = vmax.f32 %v247, 0.0
    %v264 = vmax.f32 %v248, 0.0
    %v265 = vmax.f32 %v249, 0.0
    %v266 = vmax.f32 %v250, 0.0
    %v267 = vmax.f32 %v251, 0.0
    %v268 = vmax.f32 %v252, 0.0
    %270 = vset.pattern.permute.xlu0 0
    %271 = vperm.xlu0 %270, %v38
    %v272 = vpop.permute.xlu0 %271
    %275 = vset.pattern.permute.xlu0 0
    %276 = vperm.xlu0 %275, %v39
    %v277 = vpop.permute.xlu0 %276
    %280 = vset.pattern.permute.xlu0 0
    %281 = vperm.xlu0 %280, %v40
    %v282 = vpop.permute.xlu0 %281
    %285 = vset.pattern.permute.xlu0 0
    %286 = vperm.xlu0 %285, %v41
    %v287 = vpop.permute.xlu0 %286
    %vm289 = vcmask 523264
    %v291 = vsel %vm289, %v34, 0
    %v294 = vsel %vm289, %v35, 0
    %v297 = vsel %vm289, %v36, 0
    %v300 = vsel %vm289, %v37, 0
    %302 = vmatprep.subr.mxu0 0.0
    %303 = vmatpush1.msra.mxu0 0.0
    %304 = vmatprep.subr.mxu0 0.0
    %305 = vmatpush1.msra.mxu0 0.0
    %306 = vmatprep.subr.mxu0 0.0
    %307 = vmatpush1.msra.mxu0 0.0
    %308 = vmatprep.subr.mxu0 0.0
    %309 = vmatpush1.msra.mxu0 0.0
    %310 = vmatprep.subr.mxu0 0.0
    %311 = vmatpush1.msra.mxu0 0.0
    %312 = vmatprep.subr.mxu0 0.0
    %313 = vmatpush1.msra.mxu0 0.0
    %314 = vmatprep.subr.mxu0 0.0
    %315 = vmatpush1.msra.mxu0 0.0
    %316 = vmatprep.subr.mxu0 0.0
    %317 = vmatpush1.msra.mxu0 0.0
    %318 = vmatprep.subr.mxu0 %v268
    %319 = vmatpush1.msra.mxu0 %v267
    %320 = vmatprep.subr.mxu0 %v266
    %321 = vmatpush1.msra.mxu0 %v265
    %322 = vmatprep.subr.mxu0 %v264
    %323 = vmatpush1.msra.mxu0 %v263
    %324 = vmatprep.subr.mxu0 %v262
    %325 = vmatpush1.msra.mxu0 %v261
    %326 = vmatprep.subr.mxu0 %v260
    %327 = vmatpush1.msra.mxu0 %v259
    %328 = vmatprep.subr.mxu0 %v258
    %329 = vmatpush1.msra.mxu0 %v257
    %330 = vmatprep.subr.mxu0 %v256
    %331 = vmatpush1.msra.mxu0 %v255
    %332 = vmatprep.subr.mxu0 %v254
    %333 = vmatpush1.msra.mxu0 %v253
    %334 = vmatprep.subr.mxu0 0.0
    %335 = vmatpush2.msra.mxu0 0.0
    %336 = vmatprep.subr.mxu0 0.0
    %337 = vmatpush2.msra.mxu0 0.0
    %338 = vmatprep.subr.mxu0 0.0
    %339 = vmatpush2.msra.mxu0 0.0
    %340 = vmatprep.subr.mxu0 0.0
    %341 = vmatpush2.msra.mxu0 0.0
    %342 = vmatprep.subr.mxu0 0.0
    %343 = vmatpush2.msra.mxu0 0.0
    %344 = vmatprep.subr.mxu0 0.0
    %345 = vmatpush2.msra.mxu0 0.0
    %346 = vmatprep.subr.mxu0 0.0
    %347 = vmatpush2.msra.mxu0 0.0
    %348 = vmatprep.subr.mxu0 0.0
    %349 = vmatpush2.msra.mxu0 0.0
    %350 = vmatprep.subr.mxu0 0.0
    %351 = vmatpush2.msra.mxu0 0.0
    %352 = vmatprep.subr.mxu0 0.0
    %353 = vmatpush2.msra.mxu0 0.0
    %354 = vmatprep.subr.mxu0 0.0
    %355 = vmatpush2.msra.mxu0 0.0
    %356 = vmatprep.subr.mxu0 0.0
    %357 = vmatpush2.msra.mxu0 0.0
    %358 = vmatprep.subr.mxu0 0.0
    %359 = vmatpush2.msra.mxu0 0.0
    %360 = vmatprep.subr.mxu0 0.0
    %361 = vmatpush2.msra.mxu0 0.0
    %362 = vmatprep.subr.mxu0 0.0
    %363 = vmatpush2.msra.mxu0 0.0
    %364 = vmatprep.subr.mxu0 0.0
    %365 = vmatpush2.msra.mxu0 0.0
    %366 = vmatprep.mubr.f32.mxu0 0.0
    %367 = vmatmul.mubr.f32.gmra.mxu0 %v291
    %v368 = vpop.f32.mrf.mxu0
    %v369 = vadd.f32 %v272, %v368
    %v370 = vpop.f32.mrf.mxu0
    %v371 = vadd.f32 %v272, %v370
    %372 = vmatprep.mubr.f32.mxu0 0.0
    %373 = vmatmul.mubr.f32.gmra.mxu0 %v294
    %v374 = vpop.f32.mrf.mxu0
    %v375 = vadd.f32 %v277, %v374
    %v376 = vpop.f32.mrf.mxu0
    %v377 = vadd.f32 %v277, %v376
    %378 = vmatprep.mubr.f32.mxu0 0.0
    %379 = vmatmul.mubr.f32.gmra.mxu0 %v297
    %v380 = vpop.f32.mrf.mxu0
    %v381 = vadd.f32 %v282, %v380
    %v382 = vpop.f32.mrf.mxu0
    %v383 = vadd.f32 %v282, %v382
    %384 = vmatprep.mubr.f32.mxu0 0.0
    %385 = vmatmul.mubr.f32.gmra.mxu0 %v300
    %v386 = vpop.f32.mrf.mxu0
    %v387 = vadd.f32 %v287, %v386
    %v388 = vpop.f32.mrf.mxu0
    %v389 = vadd.f32 %v287, %v388
    %390 = vdwg.mxu0
    %v391 = vmax.f32 %v369, 0.0
    %v392 = vmax.f32 %v371, 0.0
    %v393 = vmax.f32 %v375, 0.0
    %v394 = vmax.f32 %v377, 0.0
    %v395 = vmax.f32 %v381, 0.0
    %v396 = vmax.f32 %v383, 0.0
    %v397 = vmax.f32 %v387, 0.0
    %v398 = vmax.f32 %v389, 0.0
    %400 = vset.pattern.permute.xlu0 0
    %401 = vperm.xlu0 %400, %v42
    %v402 = vpop.permute.xlu0 %401
    %405 = vset.pattern.permute.xlu0 0
    %406 = vperm.xlu0 %405, %v43
    %v407 = vpop.permute.xlu0 %406
    %410 = vset.pattern.permute.xlu0 0
    %411 = vperm.xlu0 %410, %v44
    %v412 = vpop.permute.xlu0 %411
    %415 = vset.pattern.permute.xlu0 0
    %416 = vperm.xlu0 %415, %v45
    %v417 = vpop.permute.xlu0 %416
    %v419 = vmul.f32 %v402, %v391
    %v420 = vmul.f32 %v402, %v392
    %v421 = vmul.f32 %v407, %v393
    %v422 = vmul.f32 %v407, %v394
    %v423 = vmul.f32 %v412, %v395
    %v424 = vmul.f32 %v412, %v396
    %v425 = vmul.f32 %v417, %v397
    %v426 = vmul.f32 %v417, %v398
    %v427 = vadd.f32 %v419, %v421
    %v428 = vadd.f32 %v427, %v423
    %v429 = vadd.f32 %v428, %v425
    %v430 = vrot.slane %v429, 4
    %v431 = vadd.f32 %v429, %v430
    %v432 = vrot.slane %v431, 2
    %v433 = vadd.f32 %v431, %v432
    %v434 = vrot.slane %v433, 1
    %v435 = vadd.f32 %v433, %v434
    %v436 = vadd.f32 %v420, %v422
    %v437 = vadd.f32 %v436, %v424
    %v438 = vadd.f32 %v437, %v426
    %v439 = vrot.slane %v438, 4
    %v440 = vadd.f32 %v438, %v439
    %v441 = vrot.slane %v440, 2
    %v442 = vadd.f32 %v440, %v441
    %v443 = vrot.slane %v442, 1
    %v444 = vadd.f32 %v442, %v443
    %446 = vset.pattern.permute.xlu0 0
    %447 = vperm.xlu0 %446, %v46
    %v448 = vpop.permute.xlu0 %447
    %v450 = vlaneseq
    %v451 = vshrl.u32 %v450, 7
    %v452 = vsub.s32 0, %v451
    %v453 = vrot.slane %v448, %v452
    %v454 = vadd.f32 %v435, %v453
    %v455 = vadd.f32 %v444, %v453
    %v458 = vcombine.low %v454, %v455
    %v460 = vunpack.c.l.s4 1966171168
    %v461 = vunpack.c.0.s8 %v460
    %v462 = vlaneseq
    %v463 = vshrl.u32 %v462, 7
    %v464 = vsub.s32 %v461, %v463
    %v465 = vrot.slane %v458, %v464
    %v467 = vunpack.c.l.s4 1966171168
    %v468 = vunpack.c.0.s8 %v467
    %v469 = vlaneseq
    %v470 = vshrl.u32 %v469, 7
    %v471 = vsub.s32 %v468, %v470
    %v472 = vrot.slane %v465, %v471
    %v474 = vlaneseq
    %vm475 = vcmp.ge.s32.totalorder %v474, 0
    %vm476 = vcmp.lt.s32.totalorder %v474, 256
    %vm477 = vmand %vm475, %vm476
    %478 = vst.msk [vmem:[#allocation3] sm:$0x3] %vm477, %v472
    // Predicated region
    $region26: #{tpu_custom_call.1} parent=1 // pred_check
      _
    $region27: #{tpu_custom_call.1} parent=1 // pred_check_branch
      %480 = sbr.rel (0) target = $region29
    $region28: #{tpu_custom_call.1} parent=1 // pred_region
      %s482 = ssub.s32 32, 32
      %483 = vsyncadd [#allocation4], %s482
      %s485 = sshll.u32 [#allocation3], 4
      %s486 = int_to_ptr.vmem [resolvable:$true] %s485
      %488 = dma.vmem_to_hbm [thread:$0]  %s486, 32, %s6, [#allocation4]
    $region29: #{tpu_custom_call.1} parent=1 // pred_fallthru
      _
    // Predicated region
    $region30: #{tpu_custom_call.1} parent=1 // pred_check
      _
    $region31: #{tpu_custom_call.1} parent=1 // pred_check_branch
      %490 = sbr.rel (0) target = $region33
    $region32: #{tpu_custom_call.1} parent=1 // pred_region
      %491 = dma.done [#allocation4], 32
    $region33: #{tpu_custom_call.1} parent=1 // pred_fallthru
      _
    %492 = vsyncpa [#allocation4], 1

</llo_original>
